<compile_context>
chip_gen: v5e
topology: v5e:2x2
jax: 0.10.0
libtpu: 0.0.40
codegen_flags: <defaults>
</compile_context>

<pallas_src>
import functools

import jax
import jax.numpy as jnp
from jax.experimental import pallas as pl
from jax.experimental.pallas import tpu as pltpu


# ----------------------------- activations ---------------------------------
def _softsign(x):
    return x / (1.0 + jnp.abs(x))


def _softplus(x):
    return jnp.logaddexp(x, 0.0)


def _tanhshrink(x):
    return x - jnp.tanh(x)


def _rrelu_eval(x):
    # nn.RReLU in eval mode: negative slope = (lower + upper) / 2 = (1/8 + 1/3) / 2
    # TODO(synk): training-mode RReLU samples a random slope per element; eval-mode only.
    slope = (1.0 / 8.0 + 1.0 / 3.0) / 2.0
    return jnp.where(x >= 0, x, slope * x)


_ACTIVATIONS = {
    0: _softsign,
    1: _softplus,
    2: jnp.tanh,
    3: _tanhshrink,
    4: lambda x: jnp.maximum(x, 0.0),
    5: _rrelu_eval,
}

_EUP_ACTS = (1, 2, 3)   # softplus / tanh / tanhshrink go through the EUP
OUT_LANES = 128         # lane-dense padded output width (true output dim = 3)


# ------------------------------- kernel -------------------------------------
def mlp_kernel(x_ref, w0_ref, b0_ref, wh_ref, bh_ref, wl_ref, bl_ref, o_ref,
               *, act_id, hidden_layers, use_bf16_matmul):
    act = _ACTIVATIONS[act_id]

    # Input layer: the K=2 contraction is done on the VPU with two
    # broadcast-FMAs instead of wasting a full MXU push on a 2-deep matmul.
    x = x_ref[...]                                           # (TM, 2)
    h = (x[:, 0:1] * w0_ref[0:1, :]
         + x[:, 1:2] * w0_ref[1:2, :]
         + b0_ref[...])                                      # (TM, H)
    h = act(h)

    # Hidden layers: (TM, H) @ (H, H) + (1, H) on the MXU, f32 accumulation.
    for l in range(hidden_layers):
        lhs, rhs = h, wh_ref[l]
        if use_bf16_matmul:
            lhs = lhs.astype(jnp.bfloat16)
            rhs = rhs.astype(jnp.bfloat16)
        h = act(jnp.dot(lhs, rhs, preferred_element_type=jnp.float32)
                + bh_ref[l])

    # Output layer (no activation).  W_last / b_last are zero-padded to
    # OUT_LANES lanes in the wrapper so this store is lane-dense (full vst,
    # no masked partial stores); the caller slices [:, :3] afterwards.
    o_ref[...] = (jnp.dot(h, wl_ref[...], preferred_element_type=jnp.float32)
                  + bl_ref[...]).astype(o_ref.dtype)


# ------------------------------ wrapper --------------------------------------
def _round_up(x, m):
    return ((x + m - 1) // m) * m


def mlp_forward(x, params, *, act_id, tile_m=512, use_bf16_matmul=False):
    """x: (N, 2) float32 collocation points.  Returns (N, 3) float32."""
    w0, b0, wh, bh, wl, bl = params
    N, Din = x.shape
    assert Din == 2
    L, H, _ = wh.shape

    # Batch tile: as large as useful (fills the MXU M dimension, amortizes the
    # ~0.35 us/step pipeline overhead) but clamped so tiny batches don't
    # over-pad.  Must stay a multiple of 8 (sublane granularity).
    tm = min(int(tile_m), _round_up(N, 8))
    tm = max(8, (tm // 8) * 8)

    n_pad = _round_up(N, tm)
    if n_pad != N:
        x = jnp.pad(x, ((0, n_pad - N), (0, 0)))

    # Lane-dense output: pad the final layer to OUT_LANES output features.
    wl_p = jnp.pad(wl, ((0, 0), (0, OUT_LANES - wl.shape[1])))
    bl_p = jnp.pad(bl, ((0, 0), (0, OUT_LANES - bl.shape[1])))

    kernel = functools.partial(mlp_kernel, act_id=act_id, hidden_layers=L,
                               use_bf16_matmul=use_bf16_matmul)

    grid = (n_pad // tm,)

    flops = 2 * n_pad * (2 * H + L * H * H + H * 3)
    transcendentals = n_pad * H * (L + 1) if act_id in _EUP_ACTS else 0
    bytes_accessed = 4 * (x.size + w0.size + b0.size + wh.size + bh.size
                          + wl_p.size + bl_p.size + n_pad * OUT_LANES)

    out = pl.pallas_call(
        kernel,
        out_shape=jax.ShapeDtypeStruct((n_pad, OUT_LANES), jnp.float32),
        grid_spec=pltpu.PrefetchScalarGridSpec(
            num_scalar_prefetch=0,
            grid=grid,
            in_specs=[
                pl.BlockSpec((tm, 2), lambda i: (i, 0)),          # x tile
                pl.BlockSpec((2, H), lambda i: (0, 0)),           # W0
                pl.BlockSpec((1, H), lambda i: (0, 0)),           # b0
                pl.BlockSpec((L, H, H), lambda i: (0, 0, 0)),     # hidden Ws
                pl.BlockSpec((L, 1, H), lambda i: (0, 0, 0)),     # hidden bs
                pl.BlockSpec((H, OUT_LANES), lambda i: (0, 0)),   # W_last (padded)
                pl.BlockSpec((1, OUT_LANES), lambda i: (0, 0)),   # b_last (padded)
            ],
            out_specs=pl.BlockSpec((tm, OUT_LANES), lambda i: (i, 0)),
        ),
        compiler_params=pltpu.CompilerParams(
            dimension_semantics=("parallel",)),
        cost_estimate=pl.CostEstimate(
            flops=flops,
            transcendentals=transcendentals,
            bytes_accessed=bytes_accessed),
    )(x, w0, b0, wh, bh, wl_p, bl_p)

    return out[:N, :3]


# -------------------------- parameter init -----------------------------------
def init_params(key, hidden_layers, nodes_per_layer):
    """Deterministic init mimicking nn.Linear's U(-1/sqrt(fan_in), 1/sqrt(fan_in)).
    Weights are stored as (in, out)."""
    H = nodes_per_layer
    keys = jax.random.split(key, 2 * (hidden_layers + 2))

    def lin(kw, kb, fan_in, fan_out):
        bound = 1.0 / jnp.sqrt(float(fan_in))
        w = jax.random.uniform(kw, (fan_in, fan_out), jnp.float32, -bound, bound)
        b = jax.random.uniform(kb, (1, fan_out), jnp.float32, -bound, bound)
        return w, b

    w0, b0 = lin(keys[0], keys[1], 2, H)
    whs, bhs = [], []
    for l in range(hidden_layers):
        w, b = lin(keys[2 + 2 * l], keys[3 + 2 * l], H, H)
        whs.append(w)
        bhs.append(b)
    wl, bl = lin(keys[-2], keys[-1], H, 3)
    wh = jnp.stack(whs, axis=0)                     # (L, H, H)
    bh = jnp.stack(bhs, axis=0)                     # (L, 1, H)
    return w0, b0, wh, bh, wl, bl


# ---------------------------- pure-JAX reference ------------------------------
def mlp_reference(x, params, *, act_id):
    w0, b0, wh, bh, wl, bl = params
    act = _ACTIVATIONS[act_id]
    h = act(x @ w0 + b0)
    for l in range(wh.shape[0]):
        h = act(h @ wh[l] + bh[l])
    return h @ wl + bl


if __name__ == "__main__":
    HIDDEN_LAYERS = 3
    NODES_PER_LAYER = 32
    ACT_ID = 2          # Tanh
    N = 200             # (x, y) collocation points; not a tile multiple -> exercises padding

    key = jax.random.PRNGKey(0)
    k_params, k_x = jax.random.split(key)

    params = init_params(k_params, HIDDEN_LAYERS, NODES_PER_LAYER)
    x = jax.random.uniform(k_x, (N, 2), jnp.float32, -0.5, 1.5)

    # tile_m=128 here so the small test still runs a 2-step "parallel" grid
    # (and the row-padding path); production use can leave the default 512.
    out = mlp_forward(x, params, act_id=ACT_ID, tile_m=128)
    out = jax.block_until_ready(out)

    ref = mlp_reference(x, params, act_id=ACT_ID)
    assert out.shape == (N, 3)
    assert jnp.allclose(out, ref, atol=1e-5, rtol=1e-5)

    print("KERNEL_OK")
</pallas_src>

<mosaic_0001>
module attributes {stable_mosaic.version = 11 : i64} {
  func.func @mlp_kernel(%arg0: i32, %arg1: memref<128x2xf32, #tpu.memory_space<vmem>>, %arg2: memref<2x32xf32, #tpu.memory_space<vmem>>, %arg3: memref<1x32xf32, #tpu.memory_space<vmem>>, %arg4: memref<3x32x32xf32, #tpu.memory_space<vmem>>, %arg5: memref<3x1x32xf32, #tpu.memory_space<vmem>>, %arg6: memref<32x128xf32, #tpu.memory_space<vmem>>, %arg7: memref<1x128xf32, #tpu.memory_space<vmem>>, %arg8: memref<128x128xf32, #tpu.memory_space<vmem>>) attributes {dimension_semantics = [#tpu.dimension_semantics<parallel>], iteration_bounds = array<i64: 2>, scalar_prefetch = 0 : i64, scratch_operands = 0 : i64, tpu.core_type = #tpu.core_type<tc>, window_params = [{transform_indices = @transform_0, window_bounds = array<i64: 128, 2>}, {pipeline_mode = #tpu.pipeline_mode<synchronous>, transform_indices = @transform_1, window_bounds = array<i64: 2, 32>}, {pipeline_mode = #tpu.pipeline_mode<synchronous>, transform_indices = @transform_2, window_bounds = array<i64: 1, 32>}, {pipeline_mode = #tpu.pipeline_mode<synchronous>, transform_indices = @transform_3, window_bounds = array<i64: 3, 32, 32>}, {pipeline_mode = #tpu.pipeline_mode<synchronous>, transform_indices = @transform_4, window_bounds = array<i64: 3, 1, 32>}, {pipeline_mode = #tpu.pipeline_mode<synchronous>, transform_indices = @transform_5, window_bounds = array<i64: 32, 128>}, {pipeline_mode = #tpu.pipeline_mode<synchronous>, transform_indices = @transform_6, window_bounds = array<i64: 1, 128>}, {transform_indices = @transform_7, window_bounds = array<i64: 128, 128>}]} {
    %c0 = arith.constant 0 : index
    %c0_0 = arith.constant 0 : index
    %0 = vector.load %arg1[%c0, %c0_0] : memref<128x2xf32, #tpu.memory_space<vmem>>, vector<128x2xf32>
    %1 = vector.extract_strided_slice %0 {offsets = [0, 0], sizes = [128, 1], strides = [1, 1]} : vector<128x2xf32> to vector<128x1xf32>
    %c0_1 = arith.constant 0 : index
    %c0_2 = arith.constant 0 : index
    %2 = vector.load %arg2[%c0_1, %c0_2] : memref<2x32xf32, #tpu.memory_space<vmem>>, vector<1x32xf32>
    %3 = vector.broadcast %1 : vector<128x1xf32> to vector<128x32xf32>
    %4 = vector.broadcast %2 : vector<1x32xf32> to vector<128x32xf32>
    %5 = arith.mulf %3, %4 : vector<128x32xf32>
    %6 = vector.extract_strided_slice %0 {offsets = [0, 1], sizes = [128, 1], strides = [1, 1]} : vector<128x2xf32> to vector<128x1xf32>
    %c1 = arith.constant 1 : index
    %c0_3 = arith.constant 0 : index
    %7 = vector.load %arg2[%c1, %c0_3] : memref<2x32xf32, #tpu.memory_space<vmem>>, vector<1x32xf32>
    %8 = vector.broadcast %6 : vector<128x1xf32> to vector<128x32xf32>
    %9 = vector.broadcast %7 : vector<1x32xf32> to vector<128x32xf32>
    %10 = arith.mulf %8, %9 : vector<128x32xf32>
    %11 = arith.addf %5, %10 : vector<128x32xf32>
    %c0_4 = arith.constant 0 : index
    %c0_5 = arith.constant 0 : index
    %12 = vector.load %arg3[%c0_4, %c0_5] : memref<1x32xf32, #tpu.memory_space<vmem>>, vector<1x32xf32>
    %13 = vector.broadcast %12 : vector<1x32xf32> to vector<128x32xf32>
    %14 = arith.addf %11, %13 : vector<128x32xf32>
    %15 = math.tanh %14 : vector<128x32xf32>
    %c0_6 = arith.constant 0 : index
    %c0_7 = arith.constant 0 : index
    %c0_8 = arith.constant 0 : index
    %16 = vector.load %arg4[%c0_6, %c0_7, %c0_8] : memref<3x32x32xf32, #tpu.memory_space<vmem>>, vector<1x32x32xf32>
    %17 = vector.shape_cast %16 : vector<1x32x32xf32> to vector<32x32xf32>
    %cst = arith.constant dense<0.000000e+00> : vector<128x32xf32>
    %18 = tpu.matmul %15, %17, %cst {dimension_numbers = #tpu.dot_dimension_numbers<[1], [0], [0], [1], [0, 0, 1, 1], [], []>} : vector<128x32xf32>, vector<32x32xf32>, vector<128x32xf32> -> vector<128x32xf32>
    %c0_9 = arith.constant 0 : index
    %c0_10 = arith.constant 0 : index
    %c0_11 = arith.constant 0 : index
    %19 = vector.load %arg5[%c0_9, %c0_10, %c0_11] : memref<3x1x32xf32, #tpu.memory_space<vmem>>, vector<1x1x32xf32>
    %20 = vector.shape_cast %19 : vector<1x1x32xf32> to vector<1x32xf32>
    %21 = vector.broadcast %20 : vector<1x32xf32> to vector<128x32xf32>
    %22 = arith.addf %18, %21 : vector<128x32xf32>
    %23 = math.tanh %22 : vector<128x32xf32>
    %c1_12 = arith.constant 1 : index
    %c0_13 = arith.constant 0 : index
    %c0_14 = arith.constant 0 : index
    %24 = vector.load %arg4[%c1_12, %c0_13, %c0_14] : memref<3x32x32xf32, #tpu.memory_space<vmem>>, vector<1x32x32xf32>
    %25 = vector.shape_cast %24 : vector<1x32x32xf32> to vector<32x32xf32>
    %cst_15 = arith.constant dense<0.000000e+00> : vector<128x32xf32>
    %26 = tpu.matmul %23, %25, %cst_15 {dimension_numbers = #tpu.dot_dimension_numbers<[1], [0], [0], [1], [0, 0, 1, 1], [], []>} : vector<128x32xf32>, vector<32x32xf32>, vector<128x32xf32> -> vector<128x32xf32>
    %c1_16 = arith.constant 1 : index
    %c0_17 = arith.constant 0 : index
    %c0_18 = arith.constant 0 : index
    %27 = vector.load %arg5[%c1_16, %c0_17, %c0_18] : memref<3x1x32xf32, #tpu.memory_space<vmem>>, vector<1x1x32xf32>
    %28 = vector.shape_cast %27 : vector<1x1x32xf32> to vector<1x32xf32>
    %29 = vector.broadcast %28 : vector<1x32xf32> to vector<128x32xf32>
    %30 = arith.addf %26, %29 : vector<128x32xf32>
    %31 = math.tanh %30 : vector<128x32xf32>
    %c2 = arith.constant 2 : index
    %c0_19 = arith.constant 0 : index
    %c0_20 = arith.constant 0 : index
    %32 = vector.load %arg4[%c2, %c0_19, %c0_20] : memref<3x32x32xf32, #tpu.memory_space<vmem>>, vector<1x32x32xf32>
    %33 = vector.shape_cast %32 : vector<1x32x32xf32> to vector<32x32xf32>
    %cst_21 = arith.constant dense<0.000000e+00> : vector<128x32xf32>
    %34 = tpu.matmul %31, %33, %cst_21 {dimension_numbers = #tpu.dot_dimension_numbers<[1], [0], [0], [1], [0, 0, 1, 1], [], []>} : vector<128x32xf32>, vector<32x32xf32>, vector<128x32xf32> -> vector<128x32xf32>
    %c2_22 = arith.constant 2 : index
    %c0_23 = arith.constant 0 : index
    %c0_24 = arith.constant 0 : index
    %35 = vector.load %arg5[%c2_22, %c0_23, %c0_24] : memref<3x1x32xf32, #tpu.memory_space<vmem>>, vector<1x1x32xf32>
    %36 = vector.shape_cast %35 : vector<1x1x32xf32> to vector<1x32xf32>
    %37 = vector.broadcast %36 : vector<1x32xf32> to vector<128x32xf32>
    %38 = arith.addf %34, %37 : vector<128x32xf32>
    %39 = math.tanh %38 : vector<128x32xf32>
    %c0_25 = arith.constant 0 : index
    %c0_26 = arith.constant 0 : index
    %40 = vector.load %arg6[%c0_25, %c0_26] : memref<32x128xf32, #tpu.memory_space<vmem>>, vector<32x128xf32>
    %cst_27 = arith.constant dense<0.000000e+00> : vector<128x128xf32>
    %41 = tpu.matmul %39, %40, %cst_27 {dimension_numbers = #tpu.dot_dimension_numbers<[1], [0], [0], [1], [0, 0, 1, 1], [], []>} : vector<128x32xf32>, vector<32x128xf32>, vector<128x128xf32> -> vector<128x128xf32>
    %c0_28 = arith.constant 0 : index
    %c0_29 = arith.constant 0 : index
    %42 = vector.load %arg7[%c0_28, %c0_29] : memref<1x128xf32, #tpu.memory_space<vmem>>, vector<1x128xf32>
    %43 = vector.broadcast %42 : vector<1x128xf32> to vector<128x128xf32>
    %44 = arith.addf %41, %43 : vector<128x128xf32>
    %c0_30 = arith.constant 0 : index
    %c0_31 = arith.constant 0 : index
    %45 = vector.load %arg8[%c0_30, %c0_31] : memref<128x128xf32, #tpu.memory_space<vmem>>, vector<128x128xf32>
    tpu.vector_store %arg8[%c0_30, %c0_31], %44 {strides = array<i32>} : memref<128x128xf32, #tpu.memory_space<vmem>>, vector<128x128xf32>,
    return
  }
  func.func @transform_0(%arg0: i32) -> (i32, i32) {
    %c0_i32 = arith.constant 0 : i32
    %c0_i32_0 = arith.constant 0 : i32
    return %arg0, %c0_i32 : i32, i32
  }
  func.func @transform_1(%arg0: i32) -> (i32, i32) {
    %c0_i32 = arith.constant 0 : i32
    %c0_i32_0 = arith.constant 0 : i32
    %c0_i32_1 = arith.constant 0 : i32
    return %c0_i32, %c0_i32_0 : i32, i32
  }
  func.func @transform_2(%arg0: i32) -> (i32, i32) {
    %c0_i32 = arith.constant 0 : i32
    %c0_i32_0 = arith.constant 0 : i32
    %c0_i32_1 = arith.constant 0 : i32
    return %c0_i32, %c0_i32_0 : i32, i32
  }
  func.func @transform_3(%arg0: i32) -> (i32, i32, i32) {
    %c0_i32 = arith.constant 0 : i32
    %c0_i32_0 = arith.constant 0 : i32
    %c0_i32_1 = arith.constant 0 : i32
    %c0_i32_2 = arith.constant 0 : i32
    return %c0_i32, %c0_i32_0, %c0_i32_1 : i32, i32, i32
  }
  func.func @transform_4(%arg0: i32) -> (i32, i32, i32) {
    %c0_i32 = arith.constant 0 : i32
    %c0_i32_0 = arith.constant 0 : i32
    %c0_i32_1 = arith.constant 0 : i32
    %c0_i32_2 = arith.constant 0 : i32
    return %c0_i32, %c0_i32_0, %c0_i32_1 : i32, i32, i32
  }
  func.func @transform_5(%arg0: i32) -> (i32, i32) {
    %c0_i32 = arith.constant 0 : i32
    %c0_i32_0 = arith.constant 0 : i32
    %c0_i32_1 = arith.constant 0 : i32
    return %c0_i32, %c0_i32_0 : i32, i32
  }
  func.func @transform_6(%arg0: i32) -> (i32, i32) {
    %c0_i32 = arith.constant 0 : i32
    %c0_i32_0 = arith.constant 0 : i32
    %c0_i32_1 = arith.constant 0 : i32
    return %c0_i32, %c0_i32_0 : i32, i32
  }
  func.func @transform_7(%arg0: i32) -> (i32, i32) {
    %c0_i32 = arith.constant 0 : i32
    %c0_i32_0 = arith.constant 0 : i32
    return %arg0, %c0_i32 : i32, i32
  }
}

</mosaic_0001>

<llo_original>
// kernel: tpu_custom_call.1
$region0: #{tpu_custom_call.1}
  #allocation0 [shape = 'u32[]', space=smem, size = 0x4, offset = 0x4, fixed_abs, tag = 'smem constant byte address 0x4 - core index']
  #allocation1 [shape = 'u32[72,128]{1,0:T(1,128)}', space=vmem, size = 0x9000, scoped, tag = 'internal scratch']
  %s0 = inlined_call_operand.vmem [shape: f32[256,2], index: 0, kind: input, shape index: {}]
  %s1 = inlined_call_operand.vmem [shape: f32[2,32], index: 1, kind: input, shape index: {}]
  %s2 = inlined_call_operand.vmem [shape: f32[1,32], index: 2, kind: input, shape index: {}]
  %s3 = inlined_call_operand.vmem [shape: f32[3,32,32], index: 3, kind: input, shape index: {}]
  %s4 = inlined_call_operand.vmem [shape: f32[3,1,32], index: 4, kind: input, shape index: {}]
  %s5 = inlined_call_operand.vmem [shape: f32[32,128], index: 5, kind: input, shape index: {}]
  %s6 = inlined_call_operand.vmem [shape: f32[1,128], index: 6, kind: input, shape index: {}]
  %s7 = inlined_call_operand.hbm [shape: f32[256,128], index: 7, kind: output, shape index: {}]
  %s8 = sld [smem:[#allocation0]]
  $region61: #{tpu_custom_call.1} parent=0
    _
  %s10 = ssub.s32 1, %s8
  %s11 = scalar_select 0, %s10, %s8
  $region1: #{tpu_custom_call.1} parent=0
    #allocation2 [shape = 'u8[131072]{0}', space=vmem, size = 0x20000, scoped, tag = 'output window, operand 0']
    #allocation3 [shape = 's32[2]{0}', space=sflag, size = 0x8, scoped, tag = 'scoped memory for tpu_custom_call.1']
    %12 = vsyncpa [#allocation3], 0
    %s13 = scalar_lea.sflag [#allocation3], 1
    %14 = vsyncpa %s13, 0
    loop: start=0, step=1, limit=4
    $region2: #{tpu_custom_call.1} parent=1 // loop_pre_header
      _
    $region3: #{tpu_custom_call.1} parent=1 // loop_header
      %s16 = sphi 0, %s20
      %p17 = scmp.ge.s32.totalorder %s16, 4
      %s26 = sphi 0, %s28
      %s29 = sphi 0, %s26
      %s30 = sphi 0, %s29
      %s46 = sphi 0, %s30
      %s50 = sphi 0, %s50
      %s52 = sphi 0, %s50
      %s53 = sphi 0, %s52
      %s67 = sphi 0, %s53
      %s71 = sphi 0, %s71
      %s73 = sphi 0, %s71
      %s74 = sphi 0, %s73
      %s88 = sphi 0, %s74
      %s92 = sphi 0, %s92
      %s94 = sphi 0, %s92
      %s95 = sphi 0, %s94
      %s109 = sphi 0, %s95
      %s113 = sphi 0, %s113
      %s115 = sphi 0, %s113
      %s116 = sphi 0, %s115
      %s130 = sphi 0, %s116
      %s134 = sphi 0, %s134
      %s136 = sphi 0, %s134
      %s137 = sphi 0, %s136
      %s151 = sphi 0, %s137
      %s155 = sphi 0, %s155
      %s157 = sphi 0, %s155
      %s158 = sphi 0, %s157
      %s172 = sphi 0, %s158
      %s178 = sphi 0, %s180
      %s181 = sphi 0, %s178
      %s182 = sphi 0, %s181
      %s198 = sphi 0, %s182
    $region4: #{tpu_custom_call.1} parent=1 // loop_header_branch
      %19 = sbr.rel (%p17) target = $region8
    $region5: #{tpu_custom_call.1} parent=1 // loop_body
      %s21 = ssub.s32 %s16, 1
      %s22 = ssub.s32 %s16, 2
      %s23 = sadd.s32 %s16, 1
      %s24 = ssub.s32 %s16, %s23
      %p25 = scmp.eq.s32.totalorder %s24, 0
      %s27 = sadd.s32 %s26, 1
      %s28 = scalar_select %p25, %s26, %s27
      %p31 = pneg %p25
      %p32 = scmp.eq.s32.totalorder %s16, 1
      %p33 = por %p31, %p32
      %p34 = scmp.ne.s32.totalorder %s26, %s29
      %p35 = scmp.eq.s32.totalorder %s16, 0
      %p36 = por %p34, %p35
      %p37 = scmp.ne.s32.totalorder %s26, %s29
      %p38 = scmp.eq.s32.totalorder %s21, 1
      %p39 = por %p37, %p38
      %p40 = scmp.ne.s32.totalorder %s29, %s30
      %p41 = scmp.eq.s32.totalorder %s21, 0
      %p42 = por %p40, %p41
      %p43 = scmp.ne.s32.totalorder %s29, %s30
      %p44 = scmp.eq.s32.totalorder %s22, 1
      %p45 = por %p43, %p44
      %p47 = scmp.ne.s32.totalorder %s30, %s46
      %p48 = scmp.eq.s32.totalorder %s22, 0
      %p49 = por %p47, %p48
      %s51 = sadd.s32 %s50, 1
      %p54 = scmp.eq.s32.totalorder %s16, 1
      %p55 = scmp.ne.s32.totalorder %s50, %s52
      %p56 = scmp.eq.s32.totalorder %s16, 0
      %p57 = por %p55, %p56
      %p58 = scmp.ne.s32.totalorder %s50, %s52
      %p59 = scmp.eq.s32.totalorder %s21, 1
      %p60 = por %p58, %p59
      %p61 = scmp.ne.s32.totalorder %s52, %s53
      %p62 = scmp.eq.s32.totalorder %s21, 0
      %p63 = por %p61, %p62
      %p64 = scmp.ne.s32.totalorder %s52, %s53
      %p65 = scmp.eq.s32.totalorder %s22, 1
      %p66 = por %p64, %p65
      %p68 = scmp.ne.s32.totalorder %s53, %s67
      %p69 = scmp.eq.s32.totalorder %s22, 0
      %p70 = por %p68, %p69
      %s72 = sadd.s32 %s71, 1
      %p75 = scmp.eq.s32.totalorder %s16, 1
      %p76 = scmp.ne.s32.totalorder %s71, %s73
      %p77 = scmp.eq.s32.totalorder %s16, 0
      %p78 = por %p76, %p77
      %p79 = scmp.ne.s32.totalorder %s71, %s73
      %p80 = scmp.eq.s32.totalorder %s21, 1
      %p81 = por %p79, %p80
      %p82 = scmp.ne.s32.totalorder %s73, %s74
      %p83 = scmp.eq.s32.totalorder %s21, 0
      %p84 = por %p82, %p83
      %p85 = scmp.ne.s32.totalorder %s73, %s74
      %p86 = scmp.eq.s32.totalorder %s22, 1
      %p87 = por %p85, %p86
      %p89 = scmp.ne.s32.totalorder %s74, %s88
      %p90 = scmp.eq.s32.totalorder %s22, 0
      %p91 = por %p89, %p90
      %s93 = sadd.s32 %s92, 1
      %p96 = scmp.eq.s32.totalorder %s16, 1
      %p97 = scmp.ne.s32.totalorder %s92, %s94
      %p98 = scmp.eq.s32.totalorder %s16, 0
      %p99 = por %p97, %p98
      %p100 = scmp.ne.s32.totalorder %s92, %s94
      %p101 = scmp.eq.s32.totalorder %s21, 1
      %p102 = por %p100, %p101
      %p103 = scmp.ne.s32.totalorder %s94, %s95
      %p104 = scmp.eq.s32.totalorder %s21, 0
      %p105 = por %p103, %p104
      %p106 = scmp.ne.s32.totalorder %s94, %s95
      %p107 = scmp.eq.s32.totalorder %s22, 1
      %p108 = por %p106, %p107
      %p110 = scmp.ne.s32.totalorder %s95, %s109
      %p111 = scmp.eq.s32.totalorder %s22, 0
      %p112 = por %p110, %p111
      %s114 = sadd.s32 %s113, 1
      %p117 = scmp.eq.s32.totalorder %s16, 1
      %p118 = scmp.ne.s32.totalorder %s113, %s115
      %p119 = scmp.eq.s32.totalorder %s16, 0
      %p120 = por %p118, %p119
      %p121 = scmp.ne.s32.totalorder %s113, %s115
      %p122 = scmp.eq.s32.totalorder %s21, 1
      %p123 = por %p121, %p122
      %p124 = scmp.ne.s32.totalorder %s115, %s116
      %p125 = scmp.eq.s32.totalorder %s21, 0
      %p126 = por %p124, %p125
      %p127 = scmp.ne.s32.totalorder %s115, %s116
      %p128 = scmp.eq.s32.totalorder %s22, 1
      %p129 = por %p127, %p128
      %p131 = scmp.ne.s32.totalorder %s116, %s130
      %p132 = scmp.eq.s32.totalorder %s22, 0
      %p133 = por %p131, %p132
      %s135 = sadd.s32 %s134, 1
      %p138 = scmp.eq.s32.totalorder %s16, 1
      %p139 = scmp.ne.s32.totalorder %s134, %s136
      %p140 = scmp.eq.s32.totalorder %s16, 0
      %p141 = por %p139, %p140
      %p142 = scmp.ne.s32.totalorder %s134, %s136
      %p143 = scmp.eq.s32.totalorder %s21, 1
      %p144 = por %p142, %p143
      %p145 = scmp.ne.s32.totalorder %s136, %s137
      %p146 = scmp.eq.s32.totalorder %s21, 0
      %p147 = por %p145, %p146
      %p148 = scmp.ne.s32.totalorder %s136, %s137
      %p149 = scmp.eq.s32.totalorder %s22, 1
      %p150 = por %p148, %p149
      %p152 = scmp.ne.s32.totalorder %s137, %s151
      %p153 = scmp.eq.s32.totalorder %s22, 0
      %p154 = por %p152, %p153
      %s156 = sadd.s32 %s155, 1
      %p159 = scmp.eq.s32.totalorder %s16, 1
      %p160 = scmp.ne.s32.totalorder %s155, %s157
      %p161 = scmp.eq.s32.totalorder %s16, 0
      %p162 = por %p160, %p161
      %p163 = scmp.ne.s32.totalorder %s155, %s157
      %p164 = scmp.eq.s32.totalorder %s21, 1
      %p165 = por %p163, %p164
      %p166 = scmp.ne.s32.totalorder %s157, %s158
      %p167 = scmp.eq.s32.totalorder %s21, 0
      %p168 = por %p166, %p167
      %p169 = scmp.ne.s32.totalorder %s157, %s158
      %p170 = scmp.eq.s32.totalorder %s22, 1
      %p171 = por %p169, %p170
      %p173 = scmp.ne.s32.totalorder %s158, %s172
      %p174 = scmp.eq.s32.totalorder %s22, 0
      %p175 = por %p173, %p174
      %s176 = ssub.s32 %s16, %s23
      %p177 = scmp.eq.s32.totalorder %s176, 0
      %s179 = sadd.s32 %s178, 1
      %s180 = scalar_select %p177, %s178, %s179
      %p183 = pneg %p177
      %p184 = scmp.eq.s32.totalorder %s16, 1
      %p185 = por %p183, %p184
      %p186 = scmp.ne.s32.totalorder %s178, %s181
      %p187 = scmp.eq.s32.totalorder %s16, 0
      %p188 = por %p186, %p187
      %p189 = scmp.ne.s32.totalorder %s178, %s181
      %p190 = scmp.eq.s32.totalorder %s21, 1
      %p191 = por %p189, %p190
      %p192 = scmp.ne.s32.totalorder %s181, %s182
      %p193 = scmp.eq.s32.totalorder %s21, 0
      %p194 = por %p192, %p193
      %p195 = scmp.ne.s32.totalorder %s181, %s182
      %p196 = scmp.eq.s32.totalorder %s22, 1
      %p197 = por %p195, %p196
      %p199 = scmp.ne.s32.totalorder %s182, %s198
      %p200 = scmp.eq.s32.totalorder %s22, 0
      %p201 = por %p199, %p200
      %p202 = scmp.le.s32.totalorder 1, %s16
      %p203 = scmp.lt.s32.totalorder %s16, 3
      %p204 = pnand %p202, %p203
      %p205 = pneg %p204
      // Predicated region
      $region9: #{tpu_custom_call.1} parent=5 // pred_check
        _
      $region10: #{tpu_custom_call.1} parent=5 // pred_check_branch
        %207 = sbr.rel (%p204) target = $region12
      $region11: #{tpu_custom_call.1} parent=5 // pred_region
        %s208 = ssub.s32 %s16, 1
        // Predicated region
        $region13: #{tpu_custom_call.1} parent=11 // pred_check
          %p209 = pneg %p63
        $region14: #{tpu_custom_call.1} parent=11 // pred_check_branch
          %211 = sbr.rel (%p209) target = $region16
        $region15: #{tpu_custom_call.1} parent=11 // pred_region
          _
        $region16: #{tpu_custom_call.1} parent=11 // pred_fallthru
          _
        // Predicated region
        $region17: #{tpu_custom_call.1} parent=11 // pred_check
          %p212 = pneg %p84
        $region18: #{tpu_custom_call.1} parent=11 // pred_check_branch
          %214 = sbr.rel (%p212) target = $region20
        $region19: #{tpu_custom_call.1} parent=11 // pred_region
          _
        $region20: #{tpu_custom_call.1} parent=11 // pred_fallthru
          _
        // Predicated region
        $region21: #{tpu_custom_call.1} parent=11 // pred_check
          %p215 = pneg %p105
        $region22: #{tpu_custom_call.1} parent=11 // pred_check_branch
          %217 = sbr.rel (%p215) target = $region24
        $region23: #{tpu_custom_call.1} parent=11 // pred_region
          _
        $region24: #{tpu_custom_call.1} parent=11 // pred_fallthru
          _
        // Predicated region
        $region25: #{tpu_custom_call.1} parent=11 // pred_check
          %p218 = pneg %p126
        $region26: #{tpu_custom_call.1} parent=11 // pred_check_branch
          %220 = sbr.rel (%p218) target = $region28
        $region27: #{tpu_custom_call.1} parent=11 // pred_region
          _
        $region28: #{tpu_custom_call.1} parent=11 // pred_fallthru
          _
        // Predicated region
        $region29: #{tpu_custom_call.1} parent=11 // pred_check
          %p221 = pneg %p147
        $region30: #{tpu_custom_call.1} parent=11 // pred_check_branch
          %223 = sbr.rel (%p221) target = $region32
        $region31: #{tpu_custom_call.1} parent=11 // pred_region
          _
        $region32: #{tpu_custom_call.1} parent=11 // pred_fallthru
          _
        // Predicated region
        $region33: #{tpu_custom_call.1} parent=11 // pred_check
          %p224 = pneg %p168
        $region34: #{tpu_custom_call.1} parent=11 // pred_check_branch
          %226 = sbr.rel (%p224) target = $region36
        $region35: #{tpu_custom_call.1} parent=11 // pred_region
          _
        $region36: #{tpu_custom_call.1} parent=11 // pred_fallthru
          _
      $region12: #{tpu_custom_call.1} parent=5 // pred_fallthru
        _
      %p227 = scmp.lt.s32.totalorder %s16, 2
      // Predicated region
      $region37: #{tpu_custom_call.1} parent=5 // pred_check
        %p228 = pneg %p227
      $region38: #{tpu_custom_call.1} parent=5 // pred_check_branch
        %230 = sbr.rel (%p228) target = $region40
      $region39: #{tpu_custom_call.1} parent=5 // pred_region
        // Predicated region
        $region41: #{tpu_custom_call.1} parent=39 // pred_check
          %p231 = pneg %p36
        $region42: #{tpu_custom_call.1} parent=39 // pred_check_branch
          %233 = sbr.rel (%p231) target = $region44
        $region43: #{tpu_custom_call.1} parent=39 // pred_region
          %s234 = smul.u32 16, %s16
          %p235 = scmp.lt.s32.totalorder %s234, 31
          %s236 = scalar_select %p235, %s234, 31
          %s237 = smul.addr %s236, 8
          %s238 = scalar_lea.vmem %s0, %s237
          %s239 = smul.u32 16, %s16
        $region44: #{tpu_custom_call.1} parent=39 // pred_fallthru
          _
      $region40: #{tpu_custom_call.1} parent=5 // pred_fallthru
        _
      %p240 = scmp.le.s32.totalorder 1, %s16
      %p241 = scmp.lt.s32.totalorder %s16, 3
      %p242 = pnand %p240, %p241
      %p243 = pneg %p242
      // Predicated region
      $region45: #{tpu_custom_call.1} parent=5 // pred_check
        _
      $region46: #{tpu_custom_call.1} parent=5 // pred_check_branch
        %245 = sbr.rel (%p242) target = $region48
      $region47: #{tpu_custom_call.1} parent=5 // pred_region
        %s246 = ssub.s32 %s16, 1
        %s247 = smul.u32 16, %s21
        %p248 = scmp.lt.s32.totalorder %s247, 31
        %s249 = scalar_select %p248, %s247, 31
        %s250 = smul.addr %s249, 8
        %s251 = scalar_lea.vmem %s0, %s250
        %p252 = pneg %p42
        %p253 = pneg %p39
        %p254 = pneg %p63
        %p255 = pneg %p60
        %p256 = pneg %p84
        %p257 = pneg %p81
        %p258 = pneg %p105
        %p259 = pneg %p102
        %p260 = pneg %p126
        %p261 = pneg %p123
        %p262 = pneg %p147
        %p263 = pneg %p144
        %p264 = pneg %p168
        %p265 = pneg %p165
        %p266 = pneg %p194
        %p267 = pneg %p191
        %s268 = sand.u32 %s181, 1
        %s269 = scalar_lea.sflag [#allocation3], %s268
        %s270 = sand.u32 %s181, 1
        %s271 = smul.addr %s270, 128
        %s272 = scalar_lea.vmem [#allocation2], %s271
        %s273 = smul.u32 16, %s21
        %p274 = scmp.lt.s32.totalorder %s273, 31
        %s275 = scalar_select %p274, %s273, 31
        %s276 = smul.addr %s275, 8
        %s277 = scalar_lea.vmem %s0, %s276
        %s278 = smul.u32 16, %s21
        %s279 = smul.u32 16, %s21
        %v280 = vld [vmem:[%s277] sm:$0xff]
        %v281 = vld [vmem:[%s277 + $0x8] sm:$0xff]
        %v282 = vld [vmem:[%s277 + $0x10] sm:$0xff]
        %v283 = vld [vmem:[%s277 + $0x18] sm:$0xff]
        %v284 = vld [vmem:[%s277 + $0x20] sm:$0xff]
        %v285 = vld [vmem:[%s277 + $0x28] sm:$0xff]
        %v286 = vld [vmem:[%s277 + $0x30] sm:$0xff]
        %v287 = vld [vmem:[%s277 + $0x38] sm:$0xff]
        %v288 = vld [vmem:[%s277 + $0x40] sm:$0xff]
        %v289 = vld [vmem:[%s277 + $0x48] sm:$0xff]
        %v290 = vld [vmem:[%s277 + $0x50] sm:$0xff]
        %v291 = vld [vmem:[%s277 + $0x58] sm:$0xff]
        %v292 = vld [vmem:[%s277 + $0x60] sm:$0xff]
        %v293 = vld [vmem:[%s277 + $0x68] sm:$0xff]
        %v294 = vld [vmem:[%s277 + $0x70] sm:$0xff]
        %v295 = vld [vmem:[%s277 + $0x78] sm:$0xff]
        %v296 = vld [vmem:[%s1] sm:$0x1]
        %298 = vset.pattern.permute.xlu0 0
        %299 = vperm.xlu0 %298, %v280
        %v300 = vpop.permute.xlu0 %299
        %303 = vset.pattern.permute.xlu0 0
        %304 = vperm.xlu0 %303, %v281
        %v305 = vpop.permute.xlu0 %304
        %308 = vset.pattern.permute.xlu0 0
        %309 = vperm.xlu0 %308, %v282
        %v310 = vpop.permute.xlu0 %309
        %313 = vset.pattern.permute.xlu0 0
        %314 = vperm.xlu0 %313, %v283
        %v315 = vpop.permute.xlu0 %314
        %318 = vset.pattern.permute.xlu0 0
        %319 = vperm.xlu0 %318, %v284
        %v320 = vpop.permute.xlu0 %319
        %323 = vset.pattern.permute.xlu0 0
        %324 = vperm.xlu0 %323, %v285
        %v325 = vpop.permute.xlu0 %324
        %328 = vset.pattern.permute.xlu0 0
        %329 = vperm.xlu0 %328, %v286
        %v330 = vpop.permute.xlu0 %329
        %333 = vset.pattern.permute.xlu0 0
        %334 = vperm.xlu0 %333, %v287
        %v335 = vpop.permute.xlu0 %334
        %338 = vset.pattern.permute.xlu0 0
        %339 = vperm.xlu0 %338, %v288
        %v340 = vpop.permute.xlu0 %339
        %343 = vset.pattern.permute.xlu0 0
        %344 = vperm.xlu0 %343, %v289
        %v345 = vpop.permute.xlu0 %344
        %348 = vset.pattern.permute.xlu0 0
        %349 = vperm.xlu0 %348, %v290
        %v350 = vpop.permute.xlu0 %349
        %353 = vset.pattern.permute.xlu0 0
        %354 = vperm.xlu0 %353, %v291
        %v355 = vpop.permute.xlu0 %354
        %358 = vset.pattern.permute.xlu0 0
        %359 = vperm.xlu0 %358, %v292
        %v360 = vpop.permute.xlu0 %359
        %363 = vset.pattern.permute.xlu0 0
        %364 = vperm.xlu0 %363, %v293
        %v365 = vpop.permute.xlu0 %364
        %368 = vset.pattern.permute.xlu0 0
        %369 = vperm.xlu0 %368, %v294
        %v370 = vpop.permute.xlu0 %369
        %373 = vset.pattern.permute.xlu0 0
        %374 = vperm.xlu0 %373, %v295
        %v375 = vpop.permute.xlu0 %374
        %v377 = vperm.slane %v296, 0
        %v378 = vmul.f32 %v300, %v377
        %v379 = vmul.f32 %v305, %v377
        %v380 = vmul.f32 %v310, %v377
        %v381 = vmul.f32 %v315, %v377
        %v382 = vmul.f32 %v320, %v377
        %v383 = vmul.f32 %v325, %v377
        %v384 = vmul.f32 %v330, %v377
        %v385 = vmul.f32 %v335, %v377
        %v386 = vmul.f32 %v340, %v377
        %v387 = vmul.f32 %v345, %v377
        %v388 = vmul.f32 %v350, %v377
        %v389 = vmul.f32 %v355, %v377
        %v390 = vmul.f32 %v360, %v377
        %v391 = vmul.f32 %v365, %v377
        %v392 = vmul.f32 %v370, %v377
        %v393 = vmul.f32 %v375, %v377
        %v394 = vld [vmem:[%s1 + $0x1] sm:$0x1]
        %395 = vset.pattern.permute.xlu0 1
        %396 = vperm.xlu0 %395, %v280
        %v397 = vpop.permute.xlu0 %396
        %399 = vset.pattern.permute.xlu0 1
        %400 = vperm.xlu0 %399, %v281
        %v401 = vpop.permute.xlu0 %400
        %403 = vset.pattern.permute.xlu0 1
        %404 = vperm.xlu0 %403, %v282
        %v405 = vpop.permute.xlu0 %404
        %407 = vset.pattern.permute.xlu0 1
        %408 = vperm.xlu0 %407, %v283
        %v409 = vpop.permute.xlu0 %408
        %411 = vset.pattern.permute.xlu0 1
        %412 = vperm.xlu0 %411, %v284
        %v413 = vpop.permute.xlu0 %412
        %415 = vset.pattern.permute.xlu0 1
        %416 = vperm.xlu0 %415, %v285
        %v417 = vpop.permute.xlu0 %416
        %419 = vset.pattern.permute.xlu0 1
        %420 = vperm.xlu0 %419, %v286
        %v421 = vpop.permute.xlu0 %420
        %423 = vset.pattern.permute.xlu0 1
        %424 = vperm.xlu0 %423, %v287
        %v425 = vpop.permute.xlu0 %424
        %427 = vset.pattern.permute.xlu0 1
        %428 = vperm.xlu0 %427, %v288
        %v429 = vpop.permute.xlu0 %428
        %431 = vset.pattern.permute.xlu0 1
        %432 = vperm.xlu0 %431, %v289
        %v433 = vpop.permute.xlu0 %432
        %435 = vset.pattern.permute.xlu0 1
        %436 = vperm.xlu0 %435, %v290
        %v437 = vpop.permute.xlu0 %436
        %439 = vset.pattern.permute.xlu0 1
        %440 = vperm.xlu0 %439, %v291
        %v441 = vpop.permute.xlu0 %440
        %443 = vset.pattern.permute.xlu0 1
        %444 = vperm.xlu0 %443, %v292
        %v445 = vpop.permute.xlu0 %444
        %447 = vset.pattern.permute.xlu0 1
        %448 = vperm.xlu0 %447, %v293
        %v449 = vpop.permute.xlu0 %448
        %451 = vset.pattern.permute.xlu0 1
        %452 = vperm.xlu0 %451, %v294
        %v453 = vpop.permute.xlu0 %452
        %455 = vset.pattern.permute.xlu0 1
        %456 = vperm.xlu0 %455, %v295
        %v457 = vpop.permute.xlu0 %456
        %v459 = vperm.slane %v394, 0
        %v460 = vmul.f32 %v397, %v459
        %v461 = vmul.f32 %v401, %v459
        %v462 = vmul.f32 %v405, %v459
        %v463 = vmul.f32 %v409, %v459
        %v464 = vmul.f32 %v413, %v459
        %v465 = vmul.f32 %v417, %v459
        %v466 = vmul.f32 %v421, %v459
        %v467 = vmul.f32 %v425, %v459
        %v468 = vmul.f32 %v429, %v459
        %v469 = vmul.f32 %v433, %v459
        %v470 = vmul.f32 %v437, %v459
        %v471 = vmul.f32 %v441, %v459
        %v472 = vmul.f32 %v445, %v459
        %v473 = vmul.f32 %v449, %v459
        %v474 = vmul.f32 %v453, %v459
        %v475 = vmul.f32 %v457, %v459
        %v476 = vadd.f32 %v378, %v460
        %v477 = vadd.f32 %v379, %v461
        %v478 = vadd.f32 %v380, %v462
        %v479 = vadd.f32 %v381, %v463
        %v480 = vadd.f32 %v382, %v464
        %v481 = vadd.f32 %v383, %v465
        %v482 = vadd.f32 %v384, %v466
        %v483 = vadd.f32 %v385, %v467
        %v484 = vadd.f32 %v386, %v468
        %v485 = vadd.f32 %v387, %v469
        %v486 = vadd.f32 %v388, %v470
        %v487 = vadd.f32 %v389, %v471
        %v488 = vadd.f32 %v390, %v472
        %v489 = vadd.f32 %v391, %v473
        %v490 = vadd.f32 %v392, %v474
        %v491 = vadd.f32 %v393, %v475
        %v492 = vld [vmem:[%s2] sm:$0x1]
        %v494 = vperm.slane %v492, 0
        %v496 = vadd.f32 %v476, %v494
        %v497 = vadd.f32 %v477, %v494
        %v498 = vadd.f32 %v478, %v494
        %v499 = vadd.f32 %v479, %v494
        %v500 = vadd.f32 %v480, %v494
        %v501 = vadd.f32 %v481, %v494
        %v502 = vadd.f32 %v482, %v494
        %v503 = vadd.f32 %v483, %v494
        %v504 = vadd.f32 %v484, %v494
        %v505 = vadd.f32 %v485, %v494
        %v506 = vadd.f32 %v486, %v494
        %v507 = vadd.f32 %v487, %v494
        %v508 = vadd.f32 %v488, %v494
        %v509 = vadd.f32 %v489, %v494
        %v510 = vadd.f32 %v490, %v494
        %v511 = vadd.f32 %v491, %v494
        %v512 = vtanh.pop %v496
        %v513 = vtanh.pop %v497
        %v514 = vtanh.pop %v498
        %v515 = vtanh.pop %v499
        %v516 = vtanh.pop %v500
        %v517 = vtanh.pop %v501
        %v518 = vtanh.pop %v502
        %v519 = vtanh.pop %v503
        %v520 = vtanh.pop %v504
        %v521 = vtanh.pop %v505
        %v522 = vtanh.pop %v506
        %v523 = vtanh.pop %v507
        %v524 = vtanh.pop %v508
        %v525 = vtanh.pop %v509
        %v526 = vtanh.pop %v510
        %v527 = vtanh.pop %v511
        %v528 = vld [vmem:[%s3] sm:$0xff]
        %v529 = vld [vmem:[%s3 + $0x8] sm:$0xff]
        %v530 = vld [vmem:[%s3 + $0x10] sm:$0xff]
        %v531 = vld [vmem:[%s3 + $0x18] sm:$0xff]
        %v532 = vld [vmem:[%s4] sm:$0x1]
        %v534 = vperm.slane %v532, 0
        %vm536 = vcmask 261120
        %v538 = vsel %vm536, %v512, 0
        %v541 = vsel %vm536, %v513, 0
        %v544 = vsel %vm536, %v514, 0
        %v547 = vsel %vm536, %v515, 0
        %v550 = vsel %vm536, %v516, 0
        %v553 = vsel %vm536, %v517, 0
        %v556 = vsel %vm536, %v518, 0
        %v559 = vsel %vm536, %v519, 0
        %v562 = vsel %vm536, %v520, 0
        %v565 = vsel %vm536, %v521, 0
        %v568 = vsel %vm536, %v522, 0
        %v571 = vsel %vm536, %v523, 0
        %v574 = vsel %vm536, %v524, 0
        %v577 = vsel %vm536, %v525, 0
        %v580 = vsel %vm536, %v526, 0
        %v583 = vsel %vm536, %v527, 0
        %585 = vmatpush.msra.mxu0 0.0
        %586 = vmatpush.msra.mxu0 0.0
        %587 = vmatpush.msra.mxu0 0.0
        %588 = vmatpush.msra.mxu0 0.0
        %589 = vmatpush.msra.mxu0 0.0
        %590 = vmatpush.msra.mxu0 0.0
        %591 = vmatpush.msra.mxu0 0.0
        %592 = vmatpush.msra.mxu0 0.0
        %593 = vmatpush.msra.mxu0 0.0
        %594 = vmatpush.msra.mxu0 0.0
        %595 = vmatpush.msra.mxu0 0.0
        %596 = vmatpush.msra.mxu0 0.0
        %597 = vmatpush.msra.mxu0 %v531
        %598 = vmatpush.msra.mxu0 %v530
        %599 = vmatpush.msra.mxu0 %v529
        %600 = vmatpush.msra.mxu0 %v528
        %601 = vmatmul.f32.gmra.mxu0 %v538
        %v602 = vpop.f32.mrf.mxu0
        %v603 = vadd.f32 %v534, %v602
        %604 = vmatmul.f32.gmra.mxu0 %v541
        %v605 = vpop.f32.mrf.mxu0
        %v606 = vadd.f32 %v534, %v605
        %607 = vmatmul.f32.gmra.mxu0 %v544
        %v608 = vpop.f32.mrf.mxu0
        %v609 = vadd.f32 %v534, %v608
        %610 = vmatmul.f32.gmra.mxu0 %v547
        %v611 = vpop.f32.mrf.mxu0
        %v612 = vadd.f32 %v534, %v611
        %613 = vmatmul.f32.gmra.mxu0 %v550
        %v614 = vpop.f32.mrf.mxu0
        %v615 = vadd.f32 %v534, %v614
        %616 = vmatmul.f32.gmra.mxu0 %v553
        %v617 = vpop.f32.mrf.mxu0
        %v618 = vadd.f32 %v534, %v617
        %619 = vmatmul.f32.gmra.mxu0 %v556
        %v620 = vpop.f32.mrf.mxu0
        %v621 = vadd.f32 %v534, %v620
        %622 = vmatmul.f32.gmra.mxu0 %v559
        %v623 = vpop.f32.mrf.mxu0
        %v624 = vadd.f32 %v534, %v623
        %625 = vmatmul.f32.gmra.mxu0 %v562
        %v626 = vpop.f32.mrf.mxu0
        %v627 = vadd.f32 %v534, %v626
        %628 = vmatmul.f32.gmra.mxu0 %v565
        %v629 = vpop.f32.mrf.mxu0
        %v630 = vadd.f32 %v534, %v629
        %631 = vmatmul.f32.gmra.mxu0 %v568
        %v632 = vpop.f32.mrf.mxu0
        %v633 = vadd.f32 %v534, %v632
        %634 = vmatmul.f32.gmra.mxu0 %v571
        %v635 = vpop.f32.mrf.mxu0
        %v636 = vadd.f32 %v534, %v635
        %637 = vmatmul.f32.gmra.mxu0 %v574
        %v638 = vpop.f32.mrf.mxu0
        %v639 = vadd.f32 %v534, %v638
        %640 = vmatmul.f32.gmra.mxu0 %v577
        %v641 = vpop.f32.mrf.mxu0
        %v642 = vadd.f32 %v534, %v641
        %643 = vmatmul.f32.gmra.mxu0 %v580
        %v644 = vpop.f32.mrf.mxu0
        %v645 = vadd.f32 %v534, %v644
        %646 = vmatmul.f32.gmra.mxu0 %v583
        %v647 = vpop.f32.mrf.mxu0
        %v648 = vadd.f32 %v534, %v647
        %649 = vdwg.mxu0
        %v650 = vtanh.pop %v603
        %v651 = vtanh.pop %v606
        %v652 = vtanh.pop %v609
        %v653 = vtanh.pop %v612
        %v654 = vtanh.pop %v615
        %v655 = vtanh.pop %v618
        %v656 = vtanh.pop %v621
        %v657 = vtanh.pop %v624
        %v658 = vtanh.pop %v627
        %v659 = vtanh.pop %v630
        %v660 = vtanh.pop %v633
        %v661 = vtanh.pop %v636
        %v662 = vtanh.pop %v639
        %v663 = vtanh.pop %v642
        %v664 = vtanh.pop %v645
        %v665 = vtanh.pop %v648
        %s666 = scalar_lea.vmem %s3, 32
        %v667 = vld [vmem:[%s666] sm:$0xff]
        %v668 = vld [vmem:[%s666 + $0x8] sm:$0xff]
        %v669 = vld [vmem:[%s666 + $0x10] sm:$0xff]
        %v670 = vld [vmem:[%s666 + $0x18] sm:$0xff]
        %s671 = scalar_lea.vmem %s4, 1
        %v672 = vld [vmem:[%s671] sm:$0x1]
        %v674 = vperm.slane %v672, 0
        %v677 = vsel %vm536, %v650, 0
        %v680 = vsel %vm536, %v651, 0
        %v683 = vsel %vm536, %v652, 0
        %v686 = vsel %vm536, %v653, 0
        %v689 = vsel %vm536, %v654, 0
        %v692 = vsel %vm536, %v655, 0
        %v695 = vsel %vm536, %v656, 0
        %v698 = vsel %vm536, %v657, 0
        %v701 = vsel %vm536, %v658, 0
        %v704 = vsel %vm536, %v659, 0
        %v707 = vsel %vm536, %v660, 0
        %v710 = vsel %vm536, %v661, 0
        %v713 = vsel %vm536, %v662, 0
        %v716 = vsel %vm536, %v663, 0
        %v719 = vsel %vm536, %v664, 0
        %v722 = vsel %vm536, %v665, 0
        %724 = vmatpush.msra.mxu0 0.0
        %725 = vmatpush.msra.mxu0 0.0
        %726 = vmatpush.msra.mxu0 0.0
        %727 = vmatpush.msra.mxu0 0.0
        %728 = vmatpush.msra.mxu0 0.0
        %729 = vmatpush.msra.mxu0 0.0
        %730 = vmatpush.msra.mxu0 0.0
        %731 = vmatpush.msra.mxu0 0.0
        %732 = vmatpush.msra.mxu0 0.0
        %733 = vmatpush.msra.mxu0 0.0
        %734 = vmatpush.msra.mxu0 0.0
        %735 = vmatpush.msra.mxu0 0.0
        %736 = vmatpush.msra.mxu0 %v670
        %737 = vmatpush.msra.mxu0 %v669
        %738 = vmatpush.msra.mxu0 %v668
        %739 = vmatpush.msra.mxu0 %v667
        %740 = vmatmul.f32.gmra.mxu0 %v677
        %v741 = vpop.f32.mrf.mxu0
        %v742 = vadd.f32 %v674, %v741
        %743 = vmatmul.f32.gmra.mxu0 %v680
        %v744 = vpop.f32.mrf.mxu0
        %v745 = vadd.f32 %v674, %v744
        %746 = vmatmul.f32.gmra.mxu0 %v683
        %v747 = vpop.f32.mrf.mxu0
        %v748 = vadd.f32 %v674, %v747
        %749 = vmatmul.f32.gmra.mxu0 %v686
        %v750 = vpop.f32.mrf.mxu0
        %v751 = vadd.f32 %v674, %v750
        %752 = vmatmul.f32.gmra.mxu0 %v689
        %v753 = vpop.f32.mrf.mxu0
        %v754 = vadd.f32 %v674, %v753
        %755 = vmatmul.f32.gmra.mxu0 %v692
        %v756 = vpop.f32.mrf.mxu0
        %v757 = vadd.f32 %v674, %v756
        %758 = vmatmul.f32.gmra.mxu0 %v695
        %v759 = vpop.f32.mrf.mxu0
        %v760 = vadd.f32 %v674, %v759
        %761 = vmatmul.f32.gmra.mxu0 %v698
        %v762 = vpop.f32.mrf.mxu0
        %v763 = vadd.f32 %v674, %v762
        %764 = vmatmul.f32.gmra.mxu0 %v701
        %v765 = vpop.f32.mrf.mxu0
        %v766 = vadd.f32 %v674, %v765
        %767 = vmatmul.f32.gmra.mxu0 %v704
        %v768 = vpop.f32.mrf.mxu0
        %v769 = vadd.f32 %v674, %v768
        %770 = vmatmul.f32.gmra.mxu0 %v707
        %v771 = vpop.f32.mrf.mxu0
        %v772 = vadd.f32 %v674, %v771
        %773 = vmatmul.f32.gmra.mxu0 %v710
        %v774 = vpop.f32.mrf.mxu0
        %v775 = vadd.f32 %v674, %v774
        %776 = vmatmul.f32.gmra.mxu0 %v713
        %v777 = vpop.f32.mrf.mxu0
        %v778 = vadd.f32 %v674, %v777
        %779 = vmatmul.f32.gmra.mxu0 %v716
        %v780 = vpop.f32.mrf.mxu0
        %v781 = vadd.f32 %v674, %v780
        %782 = vmatmul.f32.gmra.mxu0 %v719
        %v783 = vpop.f32.mrf.mxu0
        %v784 = vadd.f32 %v674, %v783
        %785 = vmatmul.f32.gmra.mxu0 %v722
        %v786 = vpop.f32.mrf.mxu0
        %v787 = vadd.f32 %v674, %v786
        %788 = vdwg.mxu0
        %v789 = vtanh.pop %v742
        %v790 = vtanh.pop %v745
        %v791 = vtanh.pop %v748
        %v792 = vtanh.pop %v751
        %v793 = vtanh.pop %v754
        %v794 = vtanh.pop %v757
        %v795 = vtanh.pop %v760
        %v796 = vtanh.pop %v763
        %v797 = vtanh.pop %v766
        %v798 = vtanh.pop %v769
        %v799 = vtanh.pop %v772
        %v800 = vtanh.pop %v775
        %v801 = vtanh.pop %v778
        %v802 = vtanh.pop %v781
        %v803 = vtanh.pop %v784
        %v804 = vtanh.pop %v787
        %s805 = scalar_lea.vmem %s3, 64
        %v806 = vld [vmem:[%s805] sm:$0xff]
        %v807 = vld [vmem:[%s805 + $0x8] sm:$0xff]
        %v808 = vld [vmem:[%s805 + $0x10] sm:$0xff]
        %v809 = vld [vmem:[%s805 + $0x18] sm:$0xff]
        %s810 = scalar_lea.vmem %s4, 2
        %v811 = vld [vmem:[%s810] sm:$0x1]
        %v813 = vperm.slane %v811, 0
        %v816 = vsel %vm536, %v789, 0
        %v819 = vsel %vm536, %v790, 0
        %v822 = vsel %vm536, %v791, 0
        %v825 = vsel %vm536, %v792, 0
        %v828 = vsel %vm536, %v793, 0
        %v831 = vsel %vm536, %v794, 0
        %v834 = vsel %vm536, %v795, 0
        %v837 = vsel %vm536, %v796, 0
        %v840 = vsel %vm536, %v797, 0
        %v843 = vsel %vm536, %v798, 0
        %v846 = vsel %vm536, %v799, 0
        %v849 = vsel %vm536, %v800, 0
        %v852 = vsel %vm536, %v801, 0
        %v855 = vsel %vm536, %v802, 0
        %v858 = vsel %vm536, %v803, 0
        %v861 = vsel %vm536, %v804, 0
        %863 = vmatpush.msra.mxu0 0.0
        %864 = vmatpush.msra.mxu0 0.0
        %865 = vmatpush.msra.mxu0 0.0
        %866 = vmatpush.msra.mxu0 0.0
        %867 = vmatpush.msra.mxu0 0.0
        %868 = vmatpush.msra.mxu0 0.0
        %869 = vmatpush.msra.mxu0 0.0
        %870 = vmatpush.msra.mxu0 0.0
        %871 = vmatpush.msra.mxu0 0.0
        %872 = vmatpush.msra.mxu0 0.0
        %873 = vmatpush.msra.mxu0 0.0
        %874 = vmatpush.msra.mxu0 0.0
        %875 = vmatpush.msra.mxu0 %v809
        %876 = vmatpush.msra.mxu0 %v808
        %877 = vmatpush.msra.mxu0 %v807
        %878 = vmatpush.msra.mxu0 %v806
        %879 = vmatmul.f32.gmra.mxu0 %v816
        %v880 = vpop.f32.mrf.mxu0
        %v881 = vadd.f32 %v813, %v880
        %882 = vmatmul.f32.gmra.mxu0 %v819
        %v883 = vpop.f32.mrf.mxu0
        %v884 = vadd.f32 %v813, %v883
        %885 = vmatmul.f32.gmra.mxu0 %v822
        %v886 = vpop.f32.mrf.mxu0
        %v887 = vadd.f32 %v813, %v886
        %888 = vmatmul.f32.gmra.mxu0 %v825
        %v889 = vpop.f32.mrf.mxu0
        %v890 = vadd.f32 %v813, %v889
        %891 = vmatmul.f32.gmra.mxu0 %v828
        %v892 = vpop.f32.mrf.mxu0
        %v893 = vadd.f32 %v813, %v892
        %894 = vmatmul.f32.gmra.mxu0 %v831
        %v895 = vpop.f32.mrf.mxu0
        %v896 = vadd.f32 %v813, %v895
        %897 = vmatmul.f32.gmra.mxu0 %v834
        %v898 = vpop.f32.mrf.mxu0
        %v899 = vadd.f32 %v813, %v898
        %900 = vmatmul.f32.gmra.mxu0 %v837
        %v901 = vpop.f32.mrf.mxu0
        %v902 = vadd.f32 %v813, %v901
        %903 = vmatmul.f32.gmra.mxu0 %v840
        %v904 = vpop.f32.mrf.mxu0
        %v905 = vadd.f32 %v813, %v904
        %906 = vmatmul.f32.gmra.mxu0 %v843
        %v907 = vpop.f32.mrf.mxu0
        %v908 = vadd.f32 %v813, %v907
        %909 = vmatmul.f32.gmra.mxu0 %v846
        %v910 = vpop.f32.mrf.mxu0
        %v911 = vadd.f32 %v813, %v910
        %912 = vmatmul.f32.gmra.mxu0 %v849
        %v913 = vpop.f32.mrf.mxu0
        %v914 = vadd.f32 %v813, %v913
        %915 = vmatmul.f32.gmra.mxu0 %v852
        %v916 = vpop.f32.mrf.mxu0
        %v917 = vadd.f32 %v813, %v916
        %918 = vmatmul.f32.gmra.mxu0 %v855
        %v919 = vpop.f32.mrf.mxu0
        %v920 = vadd.f32 %v813, %v919
        %921 = vmatmul.f32.gmra.mxu0 %v858
        %v922 = vpop.f32.mrf.mxu0
        %v923 = vadd.f32 %v813, %v922
        %924 = vmatmul.f32.gmra.mxu0 %v861
        %v925 = vpop.f32.mrf.mxu0
        %v926 = vadd.f32 %v813, %v925
        %927 = vdwg.mxu0
        %v928 = vtanh.pop %v881
        %v929 = vtanh.pop %v884
        %v930 = vtanh.pop %v887
        %v931 = vtanh.pop %v890
        %v932 = vtanh.pop %v893
        %v933 = vtanh.pop %v896
        %v934 = vtanh.pop %v899
        %v935 = vtanh.pop %v902
        %v936 = vtanh.pop %v905
        %v937 = vtanh.pop %v908
        %v938 = vtanh.pop %v911
        %v939 = vtanh.pop %v914
        %v940 = vtanh.pop %v917
        %v941 = vtanh.pop %v920
        %v942 = vtanh.pop %v923
        %v943 = vtanh.pop %v926
        %v944 = vld [vmem:[%s5] sm:$0xff]
        %v945 = vld [vmem:[%s5 + $0x8] sm:$0xff]
        %v946 = vld [vmem:[%s5 + $0x10] sm:$0xff]
        %v947 = vld [vmem:[%s5 + $0x18] sm:$0xff]
        %v948 = vld [vmem:[%s6] sm:$0x1]
        %v950 = vperm.slane %v948, 0
        %v953 = vsel %vm536, %v928, 0
        %v956 = vsel %vm536, %v929, 0
        %v959 = vsel %vm536, %v930, 0
        %v962 = vsel %vm536, %v931, 0
        %v965 = vsel %vm536, %v932, 0
        %v968 = vsel %vm536, %v933, 0
        %v971 = vsel %vm536, %v934, 0
        %v974 = vsel %vm536, %v935, 0
        %v977 = vsel %vm536, %v936, 0
        %v980 = vsel %vm536, %v937, 0
        %v983 = vsel %vm536, %v938, 0
        %v986 = vsel %vm536, %v939, 0
        %v989 = vsel %vm536, %v940, 0
        %v992 = vsel %vm536, %v941, 0
        %v995 = vsel %vm536, %v942, 0
        %v998 = vsel %vm536, %v943, 0
        %1000 = vmatpush.msra.mxu0 0.0
        %1001 = vmatpush.msra.mxu0 0.0
        %1002 = vmatpush.msra.mxu0 0.0
        %1003 = vmatpush.msra.mxu0 0.0
        %1004 = vmatpush.msra.mxu0 0.0
        %1005 = vmatpush.msra.mxu0 0.0
        %1006 = vmatpush.msra.mxu0 0.0
        %1007 = vmatpush.msra.mxu0 0.0
        %1008 = vmatpush.msra.mxu0 0.0
        %1009 = vmatpush.msra.mxu0 0.0
        %1010 = vmatpush.msra.mxu0 0.0
        %1011 = vmatpush.msra.mxu0 0.0
        %1012 = vmatpush.msra.mxu0 %v947
        %1013 = vmatpush.msra.mxu0 %v946
        %1014 = vmatpush.msra.mxu0 %v945
        %1015 = vmatpush.msra.mxu0 %v944
        %1016 = vmatmul.f32.gmra.mxu0 %v953
        %v1017 = vpop.f32.mrf.mxu0
        %v1018 = vadd.f32 %v950, %v1017
        %1019 = vmatmul.f32.gmra.mxu0 %v956
        %v1020 = vpop.f32.mrf.mxu0
        %v1021 = vadd.f32 %v950, %v1020
        %1022 = vmatmul.f32.gmra.mxu0 %v959
        %v1023 = vpop.f32.mrf.mxu0
        %v1024 = vadd.f32 %v950, %v1023
        %1025 = vmatmul.f32.gmra.mxu0 %v962
        %v1026 = vpop.f32.mrf.mxu0
        %v1027 = vadd.f32 %v950, %v1026
        %1028 = vmatmul.f32.gmra.mxu0 %v965
        %v1029 = vpop.f32.mrf.mxu0
        %v1030 = vadd.f32 %v950, %v1029
        %1031 = vmatmul.f32.gmra.mxu0 %v968
        %v1032 = vpop.f32.mrf.mxu0
        %v1033 = vadd.f32 %v950, %v1032
        %1034 = vmatmul.f32.gmra.mxu0 %v971
        %v1035 = vpop.f32.mrf.mxu0
        %v1036 = vadd.f32 %v950, %v1035
        %1037 = vmatmul.f32.gmra.mxu0 %v974
        %v1038 = vpop.f32.mrf.mxu0
        %v1039 = vadd.f32 %v950, %v1038
        %1040 = vmatmul.f32.gmra.mxu0 %v977
        %v1041 = vpop.f32.mrf.mxu0
        %v1042 = vadd.f32 %v950, %v1041
        %1043 = vmatmul.f32.gmra.mxu0 %v980
        %v1044 = vpop.f32.mrf.mxu0
        %v1045 = vadd.f32 %v950, %v1044
        %1046 = vmatmul.f32.gmra.mxu0 %v983
        %v1047 = vpop.f32.mrf.mxu0
        %v1048 = vadd.f32 %v950, %v1047
        %1049 = vmatmul.f32.gmra.mxu0 %v986
        %v1050 = vpop.f32.mrf.mxu0
        %v1051 = vadd.f32 %v950, %v1050
        %1052 = vmatmul.f32.gmra.mxu0 %v989
        %v1053 = vpop.f32.mrf.mxu0
        %v1054 = vadd.f32 %v950, %v1053
        %1055 = vmatmul.f32.gmra.mxu0 %v992
        %v1056 = vpop.f32.mrf.mxu0
        %v1057 = vadd.f32 %v950, %v1056
        %1058 = vmatmul.f32.gmra.mxu0 %v995
        %v1059 = vpop.f32.mrf.mxu0
        %v1060 = vadd.f32 %v950, %v1059
        %1061 = vmatmul.f32.gmra.mxu0 %v998
        %v1062 = vpop.f32.mrf.mxu0
        %v1063 = vadd.f32 %v950, %v1062
        %1064 = vdwg.mxu0
        %1065 = vst [vmem:[%s272] sm:$0xff] %v1018
        %1066 = vst [vmem:[%s272 + $0x8] sm:$0xff] %v1021
        %1067 = vst [vmem:[%s272 + $0x10] sm:$0xff] %v1024
        %1068 = vst [vmem:[%s272 + $0x18] sm:$0xff] %v1027
        %1069 = vst [vmem:[%s272 + $0x20] sm:$0xff] %v1030
        %1070 = vst [vmem:[%s272 + $0x28] sm:$0xff] %v1033
        %1071 = vst [vmem:[%s272 + $0x30] sm:$0xff] %v1036
        %1072 = vst [vmem:[%s272 + $0x38] sm:$0xff] %v1039
        %1073 = vst [vmem:[%s272 + $0x40] sm:$0xff] %v1042
        %1074 = vst [vmem:[%s272 + $0x48] sm:$0xff] %v1045
        %1075 = vst [vmem:[%s272 + $0x50] sm:$0xff] %v1048
        %1076 = vst [vmem:[%s272 + $0x58] sm:$0xff] %v1051
        %1077 = vst [vmem:[%s272 + $0x60] sm:$0xff] %v1054
        %1078 = vst [vmem:[%s272 + $0x68] sm:$0xff] %v1057
        %1079 = vst [vmem:[%s272 + $0x70] sm:$0xff] %v1060
        %1080 = vst [vmem:[%s272 + $0x78] sm:$0xff] %v1063
        %s1081 = sand.u32 %s181, 1
        %s1082 = scalar_lea.sflag [#allocation3], %s1081
        %s1083 = sand.u32 %s181, 1
        %s1084 = smul.addr %s1083, 128
        %s1085 = scalar_lea.vmem [#allocation2], %s1084
        // Predicated region
        $region49: #{tpu_custom_call.1} parent=47 // pred_check
          %p1086 = pneg %p191
        $region50: #{tpu_custom_call.1} parent=47 // pred_check_branch
          %1088 = sbr.rel (%p1086) target = $region52
        $region51: #{tpu_custom_call.1} parent=47 // pred_region
          %s1089 = smul.u32 16, %s21
          %1091 = vsyncadd %s1082, 0
          %s1092 = smul.addr %s1089, 8
          %s1093 = scalar_lea.hbm %s7, %s1092
          %s1094 = sshll.u32 %s1085, 4
          %s1095 = int_to_ptr.vmem [resolvable:$true] %s1094
          %s1096 = sshll.u32 %s1093, 4
          %s1097 = int_to_ptr.hbm [resolvable:$true] %s1096
          %1102 = dma.vmem_to_hbm [thread:$0]  %s1095, 2048, %s1097, %s1082, 128, 128, 8
        $region52: #{tpu_custom_call.1} parent=47 // pred_fallthru
          _
      $region48: #{tpu_custom_call.1} parent=5 // pred_fallthru
        _
      %p1103 = scmp.le.s32.totalorder 2, %s16
      // Predicated region
      $region53: #{tpu_custom_call.1} parent=5 // pred_check
        %p1104 = pneg %p1103
      $region54: #{tpu_custom_call.1} parent=5 // pred_check_branch
        %1106 = sbr.rel (%p1104) target = $region56
      $region55: #{tpu_custom_call.1} parent=5 // pred_region
        %s1107 = ssub.s32 %s16, 2
        // Predicated region
        $region57: #{tpu_custom_call.1} parent=55 // pred_check
          %p1108 = pneg %p197
        $region58: #{tpu_custom_call.1} parent=55 // pred_check_branch
          %1110 = sbr.rel (%p1108) target = $region60
        $region59: #{tpu_custom_call.1} parent=55 // pred_region
          %s1111 = sand.u32 %s182, 1
          %s1112 = scalar_lea.sflag [#allocation3], %s1111
          %s1113 = sand.u32 %s182, 1
          %s1114 = smul.addr %s1113, 128
          %s1115 = scalar_lea.vmem [#allocation2], %s1114
          %1117 = dma.done %s1112, 2048
        $region60: #{tpu_custom_call.1} parent=55 // pred_fallthru
          _
      $region56: #{tpu_custom_call.1} parent=5 // pred_fallthru
        _
    $region6: #{tpu_custom_call.1} parent=1 // loop_footer
      %s20 = sadd.s32 1, %s16
    $region7: #{tpu_custom_call.1} parent=1 // loop_footer_branch
      %15 = sbr.rel target = $region3
    $region8: #{tpu_custom_call.1} parent=1 // loop_exit
      _
    %1118 = vsyncpa [#allocation3], 1
    %s1119 = scalar_lea.sflag [#allocation3], 1
    %1120 = vsyncpa %s1119, 1

</llo_original>
